<compile_context>
chip_gen: v6e
topology: v6e:2x2x1
jax: 0.10.0
libtpu: 0.0.40
codegen_flags: <defaults>
</compile_context>

<pallas_src>
import functools
from typing import NamedTuple

import jax
import jax.numpy as jnp
from jax.experimental import pallas as pl
from jax.experimental.pallas import tpu as pltpu


_LANES = 128
_SUBLANES = 8
_DEF_MAX_TILE_ROWS = 2048      # (2048, 128) f32 tile = 1 MiB per input stream
_MIN_KERNEL_ELEMS = 1 << 16    # below this, XLA's fused reduce beats a kernel launch


class FlowOutput(NamedTuple):
    """Mimics the attribute-bag `output` object from the PyTorch code."""
    nf_loss: jax.Array   # (B, K, 2)
    pred_jts: jax.Array  # (B, K, 2)
    sigma: jax.Array     # (B, K, 2)  -- read by forward() but unused


def _l1_gaussian_kernel(nf_ref, pred_ref, gt_ref, out_ref, *, acc_rows):
    """Blocks: nf/pred/gt (tile_rows, 128); out (acc_rows, 128) f32 accumulator."""
    # The output block index only depends on the leading ("parallel") axis, so
    # it stays resident in VMEM across the trailing ("arbitrary") reduction
    # axis: zero it on the first reduction step of each split.
    @pl.when(pl.program_id(1) == 0)
    def _init():
        out_ref[...] = jnp.zeros_like(out_ref)

    nf = nf_ref[...].astype(jnp.float32)
    pred = pred_ref[...].astype(jnp.float32)
    gt = gt_ref[...].astype(jnp.float32)
    vals = nf + jnp.abs(gt - pred)              # weight1 * nf_loss + |gt - pred|  (VPU)

    if acc_rows == _SUBLANES:
        # tile_rows % 8 == 0: fold rows onto the (8, 128) accumulator with pure
        # vreg adds; the cross-lane reduction is deferred to the wrapper.
        out_ref[...] += vals.reshape(-1, _SUBLANES, _LANES).sum(axis=0)
    else:
        # Small single-tile case (tile_rows < 8): one sublane reduction per tile.
        out_ref[...] += vals.sum(axis=0, keepdims=True)


def _partial_sum_pallas(nf2d, pred2d, gt2d, *, tile_rows, n_tiles, num_splits):
    """Sum of nf + |gt - pred| over the first n_tiles*tile_rows rows of (rows,128) inputs."""
    rows_used = n_tiles * tile_rows
    tiles_per_split = n_tiles // num_splits
    acc_rows = _SUBLANES if tile_rows % _SUBLANES == 0 else 1

    def in_map(c, i):
        return (c * tiles_per_split + i, 0)

    in_spec = pl.BlockSpec((tile_rows, _LANES), in_map)
    bytes_in = sum(x.dtype.itemsize for x in (nf2d, pred2d, gt2d)) * rows_used * _LANES

    partials = pl.pallas_call(
        functools.partial(_l1_gaussian_kernel, acc_rows=acc_rows),
        out_shape=jax.ShapeDtypeStruct((num_splits * acc_rows, _LANES), jnp.float32),
        grid=(num_splits, tiles_per_split),
        in_specs=[in_spec, in_spec, in_spec],
        out_specs=pl.BlockSpec((acc_rows, _LANES), lambda c, i: (c, 0)),
        compiler_params=pltpu.CompilerParams(
            dimension_semantics=("parallel", "arbitrary"),
        ),
        cost_estimate=pl.CostEstimate(
            flops=4 * rows_used * _LANES,
            transcendentals=0,
            bytes_accessed=bytes_in + num_splits * acc_rows * _LANES * 4,
        ),
    )(nf2d, pred2d, gt2d)
    return jnp.sum(partials)


def l1_gaussian_regression_newflow(output: FlowOutput, labels: jax.Array, *,
                                   size_average: bool = True,
                                   max_tile_rows: int = _DEF_MAX_TILE_ROWS,
                                   min_kernel_elems: int = _MIN_KERNEL_ELEMS) -> jax.Array:
    nf_loss = output.nf_loss
    pred_jts = output.pred_jts
    gt_uv = labels

    batch = nf_loss.shape[0]
    n = nf_loss.size

    def _fallback():
        gaussian = jnp.abs(gt_uv.astype(jnp.float32) - pred_jts.astype(jnp.float32))
        s = jnp.sum(nf_loss.astype(jnp.float32) + gaussian)
        return s / batch if size_average else s

    # Tiny pose heads / lane-misaligned element counts: XLA's fused reduce is
    # already at the HBM roofline and avoids launch overhead / re-layout copies.
    # TODO(synk): lane-misaligned n (n % 128 != 0) could be handled copy-free
    # with 1-D blocks + in-kernel tail masking if it shows up in training.
    if n < min_kernel_elems or n % _LANES != 0 or n < _LANES:
        return _fallback()

    rows = n // _LANES
    nf_flat = nf_loss.reshape(-1)       # free (contiguous)
    pred_flat = pred_jts.reshape(-1)
    gt_flat = gt_uv.reshape(-1)

    if rows <= max_tile_rows:
        tile_rows, n_tiles = rows, 1                    # single full-array block
    else:
        tile_rows = max(_SUBLANES, (max_tile_rows // _SUBLANES) * _SUBLANES)
        n_tiles = rows // tile_rows
    # Split the row-tile range across 2 TensorCores (v7x); no-op cost on 1-TC chips.
    num_splits = 2 if (n_tiles >= 2 and n_tiles % 2 == 0) else 1
    rows_used = n_tiles * tile_rows

    # n % 128 == 0 -> these reshapes are bitcasts (no HBM copies, native dtype).
    nf2d = nf_flat.reshape(rows, _LANES)
    pred2d = pred_flat.reshape(rows, _LANES)
    gt2d = gt_flat.reshape(rows, _LANES)

    total = _partial_sum_pallas(nf2d, pred2d, gt2d, tile_rows=tile_rows,
                                n_tiles=n_tiles, num_splits=num_splits)

    rem = rows_used * _LANES
    if rem < n:
        # Fused slice + reduce: reads only the remainder bytes, no padding copies.
        total = total + jnp.sum(
            nf_flat[rem:].astype(jnp.float32)
            + jnp.abs(gt_flat[rem:].astype(jnp.float32)
                      - pred_flat[rem:].astype(jnp.float32)))

    return total / batch if size_average else total


def _reference_loss(output: FlowOutput, labels: jax.Array, size_average=True):
    """Pure-JAX reference mirroring the PyTorch forward."""
    gaussian = jnp.abs(labels - output.pred_jts)
    nf = 1.0 * output.nf_loss + gaussian
    return nf.sum() / output.nf_loss.shape[0] if size_average else nf.sum()


if __name__ == "__main__":
    key = jax.random.PRNGKey(0)

    def make_inputs(k, B, K, D=2):
        k1, k2, k3, k4 = jax.random.split(k, 4)
        nf = jax.random.normal(k1, (B, K, D), dtype=jnp.float32)
        pred = jax.random.normal(k2, (B, K, D), dtype=jnp.float32)
        sigma = jax.nn.sigmoid(jax.random.normal(k3, (B, K, D), dtype=jnp.float32))
        gt = jax.random.normal(k4, (B, K, D), dtype=jnp.float32)
        return FlowOutput(nf_loss=nf, pred_jts=pred, sigma=sigma), gt

    # Small pose-head shapes; kernel path forced with min_kernel_elems=0.
    cases = [
        # 4 row-tiles, 2-way parallel split across the leading grid axis
        dict(B=8, K=256, max_tile_rows=8, min_kernel_elems=0),
        # 1 full tile + one remainder row handled by the fused jnp epilogue
        dict(B=9, K=64, max_tile_rows=8, min_kernel_elems=0),
        # single (3, 128) full-array block (acc_rows = 1 path)
        dict(B=3, K=64, max_tile_rows=_DEF_MAX_TILE_ROWS, min_kernel_elems=0),
    ]
    keys = jax.random.split(key, len(cases) + 1)
    for cfg, k in zip(cases, keys[:-1]):
        out, gt = make_inputs(k, cfg["B"], cfg["K"])
        loss = l1_gaussian_regression_newflow(
            out, gt, max_tile_rows=cfg["max_tile_rows"],
            min_kernel_elems=cfg["min_kernel_elems"])
        loss = jax.block_until_ready(loss)
        ref = _reference_loss(out, gt)
        assert jnp.allclose(loss, ref, rtol=1e-5, atol=1e-5), (cfg, loss, ref)

    # Tiny head (B=2, K=8) -> automatic pure-JAX fallback path.
    out, gt = make_inputs(keys[-1], 2, 8)
    loss = jax.block_until_ready(l1_gaussian_regression_newflow(out, gt))
    ref = _reference_loss(out, gt)
    assert jnp.allclose(loss, ref, rtol=1e-5, atol=1e-5), (loss, ref)

    print("KERNEL_OK")
</pallas_src>

<mosaic_0001>
module attributes {stable_mosaic.version = 11 : i64} {
  func.func @_l1_gaussian_kernel(%arg0: i32, %arg1: i32, %arg2: memref<8x128xf32, #tpu.memory_space<vmem>>, %arg3: memref<8x128xf32, #tpu.memory_space<vmem>>, %arg4: memref<8x128xf32, #tpu.memory_space<vmem>>, %arg5: memref<8x128xf32, #tpu.memory_space<vmem>>) attributes {dimension_semantics = [#tpu.dimension_semantics<parallel>, #tpu.dimension_semantics<arbitrary>], iteration_bounds = array<i64: 2, 2>, scalar_prefetch = 0 : i64, scratch_operands = 0 : i64, tpu.core_type = #tpu.core_type<tc>, window_params = [{transform_indices = @transform_0, window_bounds = array<i64: 8, 128>}, {transform_indices = @transform_1, window_bounds = array<i64: 8, 128>}, {transform_indices = @transform_2, window_bounds = array<i64: 8, 128>}, {transform_indices = @transform_3, window_bounds = array<i64: 8, 128>}]} {
    %c0_i32 = arith.constant 0 : i32
    %0 = arith.cmpi eq, %arg1, %c0_i32 : i32
    %1 = arith.extui %0 : i1 to i32
    %c0_i32_0 = arith.constant 0 : i32
    %2 = arith.cmpi ne, %1, %c0_i32_0 : i32
    scf.if %2 {
      %cst_10 = arith.constant 0.000000e+00 : f32
      %14 = vector.broadcast %cst_10 : f32 to vector<8x128xf32>
      %c0_11 = arith.constant 0 : index
      %c0_12 = arith.constant 0 : index
      %15 = vector.load %arg5[%c0_11, %c0_12] : memref<8x128xf32, #tpu.memory_space<vmem>>, vector<8x128xf32>
      tpu.vector_store %arg5[%c0_11, %c0_12], %14 {strides = array<i32>} : memref<8x128xf32, #tpu.memory_space<vmem>>, vector<8x128xf32>,
    } else {
    }
    %c0 = arith.constant 0 : index
    %c0_1 = arith.constant 0 : index
    %3 = vector.load %arg2[%c0, %c0_1] : memref<8x128xf32, #tpu.memory_space<vmem>>, vector<8x128xf32>
    %c0_2 = arith.constant 0 : index
    %c0_3 = arith.constant 0 : index
    %4 = vector.load %arg3[%c0_2, %c0_3] : memref<8x128xf32, #tpu.memory_space<vmem>>, vector<8x128xf32>
    %c0_4 = arith.constant 0 : index
    %c0_5 = arith.constant 0 : index
    %5 = vector.load %arg4[%c0_4, %c0_5] : memref<8x128xf32, #tpu.memory_space<vmem>>, vector<8x128xf32>
    %6 = arith.subf %5, %4 : vector<8x128xf32>
    %7 = math.absf %6 : vector<8x128xf32>
    %8 = arith.addf %3, %7 : vector<8x128xf32>
    %c0_6 = arith.constant 0 : index
    %c0_7 = arith.constant 0 : index
    %9 = vector.load %arg5[%c0_6, %c0_7] : memref<8x128xf32, #tpu.memory_space<vmem>>, vector<8x128xf32>
    %10 = vector.shape_cast %8 : vector<8x128xf32> to vector<1x8x128xf32>
    %cst = arith.constant dense<0.000000e+00> : vector<8x128xf32>
    %11 = vector.multi_reduction <add>, %10, %cst [0] : vector<1x8x128xf32> to vector<8x128xf32>
    %12 = arith.addf %9, %11 : vector<8x128xf32>
    %c0_8 = arith.constant 0 : index
    %c0_9 = arith.constant 0 : index
    %13 = vector.load %arg5[%c0_8, %c0_9] : memref<8x128xf32, #tpu.memory_space<vmem>>, vector<8x128xf32>
    tpu.vector_store %arg5[%c0_8, %c0_9], %12 {strides = array<i32>} : memref<8x128xf32, #tpu.memory_space<vmem>>, vector<8x128xf32>,
    return
  }
  func.func @transform_0(%arg0: i32, %arg1: i32) -> (i32, i32) {
    %c2_i32 = arith.constant 2 : i32
    %0 = arith.muli %arg0, %c2_i32 : i32
    %1 = arith.addi %0, %arg1 : i32
    %c0_i32 = arith.constant 0 : i32
    %c0_i32_0 = arith.constant 0 : i32
    return %1, %c0_i32 : i32, i32
  }
  func.func @transform_1(%arg0: i32, %arg1: i32) -> (i32, i32) {
    %c2_i32 = arith.constant 2 : i32
    %0 = arith.muli %arg0, %c2_i32 : i32
    %1 = arith.addi %0, %arg1 : i32
    %c0_i32 = arith.constant 0 : i32
    %c0_i32_0 = arith.constant 0 : i32
    return %1, %c0_i32 : i32, i32
  }
  func.func @transform_2(%arg0: i32, %arg1: i32) -> (i32, i32) {
    %c2_i32 = arith.constant 2 : i32
    %0 = arith.muli %arg0, %c2_i32 : i32
    %1 = arith.addi %0, %arg1 : i32
    %c0_i32 = arith.constant 0 : i32
    %c0_i32_0 = arith.constant 0 : i32
    return %1, %c0_i32 : i32, i32
  }
  func.func @transform_3(%arg0: i32, %arg1: i32) -> (i32, i32) {
    %c0_i32 = arith.constant 0 : i32
    %c0_i32_0 = arith.constant 0 : i32
    return %arg0, %c0_i32 : i32, i32
  }
}

</mosaic_0001>

<llo_original>
// kernel: tpu_custom_call.1
$region0: #{tpu_custom_call.1}
  #allocation0 [shape = 'u32[]', space=smem, size = 0x4, offset = 0x4, fixed_abs, tag = 'smem constant byte address 0x4 - core index']
  #allocation1 [shape = 'u32[144,128]{1,0:T(1,128)}', space=vmem, size = 0x12000, scoped, tag = 'internal scratch']
  %s0 = inlined_call_operand.hbm [shape: f32[32,128], index: 0, kind: input, shape index: {}]
  %s1 = inlined_call_operand.hbm [shape: f32[32,128], index: 1, kind: input, shape index: {}]
  %s2 = inlined_call_operand.hbm [shape: f32[32,128], index: 2, kind: input, shape index: {}]
  %s3 = inlined_call_operand.hbm [shape: f32[16,128], index: 3, kind: output, shape index: {}]
  %s4 = sld [smem:[#allocation0]]
  $region61: #{tpu_custom_call.1} parent=0
    _
  %s6 = ssub.s32 1, %s4
  %s7 = scalar_select 0, %s6, %s4
  $region1: #{tpu_custom_call.1} parent=0
    #allocation2 [shape = 'u8[8192]{0}', space=vmem, size = 0x2000, scoped, tag = 'input window, operand 0']
    #allocation3 [shape = 's32[2]{0}', space=sflag, size = 0x8, scoped, tag = 'scoped memory for tpu_custom_call.1']
    #allocation4 [shape = 's32[2]{0}', space=sflag, size = 0x8, scoped, tag = 'scoped memory for tpu_custom_call.1']
    #allocation5 [shape = 'u8[8192]{0}', space=vmem, size = 0x2000, scoped, tag = 'input window, operand 1']
    #allocation6 [shape = 's32[2]{0}', space=sflag, size = 0x8, scoped, tag = 'scoped memory for tpu_custom_call.1']
    #allocation7 [shape = 'u8[8192]{0}', space=vmem, size = 0x2000, scoped, tag = 'input window, operand 2']
    #allocation8 [shape = 'u8[8192]{0}', space=vmem, size = 0x2000, scoped, tag = 'output window, operand 0']
    %8 = vsyncpa [#allocation3], 0
    %s9 = scalar_lea.sflag [#allocation3], 1
    %10 = vsyncpa %s9, 0
    %11 = vsyncpa [#allocation6], 0
    %s12 = scalar_lea.sflag [#allocation6], 1
    %13 = vsyncpa %s12, 0
    %14 = vsyncpa [#allocation4], 0
    %s15 = scalar_lea.sflag [#allocation4], 1
    %16 = vsyncpa %s15, 0
    loop: start=0, step=1, limit=6
    $region2: #{tpu_custom_call.1} parent=1 // loop_pre_header
      _
    $region3: #{tpu_custom_call.1} parent=1 // loop_header
      %s18 = sphi 0, %s22
      %p19 = scmp.ge.s32.totalorder %s18, 6
      %s25 = sphi 0, %s37
      %s26 = sphi 0, %s33
      %s27 = sphi 0, %s25
      %s28 = sphi 0, %s26
      %s29 = sphi 0, %s27
      %s30 = sphi 0, %s28
      %s44 = sphi 0, %s46
      %s47 = sphi 0, %s44
      %s48 = sphi 0, %s47
      %s64 = sphi 0, %s48
      %s74 = sphi 0, %s76
      %s77 = sphi 0, %s74
      %s78 = sphi 0, %s77
      %s94 = sphi 0, %s78
      %s104 = sphi 0, %s106
      %s107 = sphi 0, %s104
      %s108 = sphi 0, %s107
      %s124 = sphi 0, %s108
      %s130 = sphi 0, %s132
      %s133 = sphi 0, %s130
      %s134 = sphi 0, %s133
      %s150 = sphi 0, %s134
    $region4: #{tpu_custom_call.1} parent=1 // loop_header_branch
      %21 = sbr.rel (%p19) target = $region8
    $region5: #{tpu_custom_call.1} parent=1 // loop_body
      %s23 = ssub.s32 %s18, 1
      %s24 = ssub.s32 %s18, 2
      %s31 = sadd.s32 1, %s26
      %p32 = scmp.ge.s32.totalorder %s31, 2
      %s33 = scalar_select %p32, 0, %s31
      %s34 = sadd.s32 1, %s25
      %s35 = scalar_select %p32, %s34, %s25
      %p36 = scmp.ge.s32.totalorder %s35, 2
      %s37 = scalar_select %p36, 0, %s35
      %s38 = smul.u32 %s25, 2
      %s39 = sadd.s32 %s38, %s26
      %s40 = smul.u32 %s37, 2
      %s41 = sadd.s32 %s40, %s33
      %s42 = ssub.s32 %s39, %s41
      %p43 = scmp.eq.s32.totalorder %s42, 0
      %s45 = sadd.s32 %s44, 1
      %s46 = scalar_select %p43, %s44, %s45
      %p49 = pneg %p43
      %p50 = scmp.eq.s32.totalorder %s18, 3
      %p51 = por %p49, %p50
      %p52 = scmp.ne.s32.totalorder %s44, %s47
      %p53 = scmp.eq.s32.totalorder %s18, 0
      %p54 = por %p52, %p53
      %p55 = scmp.ne.s32.totalorder %s44, %s47
      %p56 = scmp.eq.s32.totalorder %s23, 3
      %p57 = por %p55, %p56
      %p58 = scmp.ne.s32.totalorder %s47, %s48
      %p59 = scmp.eq.s32.totalorder %s23, 0
      %p60 = por %p58, %p59
      %p61 = scmp.ne.s32.totalorder %s47, %s48
      %p62 = scmp.eq.s32.totalorder %s24, 3
      %p63 = por %p61, %p62
      %p65 = scmp.ne.s32.totalorder %s48, %s64
      %p66 = scmp.eq.s32.totalorder %s24, 0
      %p67 = por %p65, %p66
      %s68 = smul.u32 %s25, 2
      %s69 = sadd.s32 %s68, %s26
      %s70 = smul.u32 %s37, 2
      %s71 = sadd.s32 %s70, %s33
      %s72 = ssub.s32 %s69, %s71
      %p73 = scmp.eq.s32.totalorder %s72, 0
      %s75 = sadd.s32 %s74, 1
      %s76 = scalar_select %p73, %s74, %s75
      %p79 = pneg %p73
      %p80 = scmp.eq.s32.totalorder %s18, 3
      %p81 = por %p79, %p80
      %p82 = scmp.ne.s32.totalorder %s74, %s77
      %p83 = scmp.eq.s32.totalorder %s18, 0
      %p84 = por %p82, %p83
      %p85 = scmp.ne.s32.totalorder %s74, %s77
      %p86 = scmp.eq.s32.totalorder %s23, 3
      %p87 = por %p85, %p86
      %p88 = scmp.ne.s32.totalorder %s77, %s78
      %p89 = scmp.eq.s32.totalorder %s23, 0
      %p90 = por %p88, %p89
      %p91 = scmp.ne.s32.totalorder %s77, %s78
      %p92 = scmp.eq.s32.totalorder %s24, 3
      %p93 = por %p91, %p92
      %p95 = scmp.ne.s32.totalorder %s78, %s94
      %p96 = scmp.eq.s32.totalorder %s24, 0
      %p97 = por %p95, %p96
      %s98 = smul.u32 %s25, 2
      %s99 = sadd.s32 %s98, %s26
      %s100 = smul.u32 %s37, 2
      %s101 = sadd.s32 %s100, %s33
      %s102 = ssub.s32 %s99, %s101
      %p103 = scmp.eq.s32.totalorder %s102, 0
      %s105 = sadd.s32 %s104, 1
      %s106 = scalar_select %p103, %s104, %s105
      %p109 = pneg %p103
      %p110 = scmp.eq.s32.totalorder %s18, 3
      %p111 = por %p109, %p110
      %p112 = scmp.ne.s32.totalorder %s104, %s107
      %p113 = scmp.eq.s32.totalorder %s18, 0
      %p114 = por %p112, %p113
      %p115 = scmp.ne.s32.totalorder %s104, %s107
      %p116 = scmp.eq.s32.totalorder %s23, 3
      %p117 = por %p115, %p116
      %p118 = scmp.ne.s32.totalorder %s107, %s108
      %p119 = scmp.eq.s32.totalorder %s23, 0
      %p120 = por %p118, %p119
      %p121 = scmp.ne.s32.totalorder %s107, %s108
      %p122 = scmp.eq.s32.totalorder %s24, 3
      %p123 = por %p121, %p122
      %p125 = scmp.ne.s32.totalorder %s108, %s124
      %p126 = scmp.eq.s32.totalorder %s24, 0
      %p127 = por %p125, %p126
      %s128 = ssub.s32 %s25, %s37
      %p129 = scmp.eq.s32.totalorder %s128, 0
      %s131 = sadd.s32 %s130, 1
      %s132 = scalar_select %p129, %s130, %s131
      %p135 = pneg %p129
      %p136 = scmp.eq.s32.totalorder %s18, 3
      %p137 = por %p135, %p136
      %p138 = scmp.ne.s32.totalorder %s130, %s133
      %p139 = scmp.eq.s32.totalorder %s18, 0
      %p140 = por %p138, %p139
      %p141 = scmp.ne.s32.totalorder %s130, %s133
      %p142 = scmp.eq.s32.totalorder %s23, 3
      %p143 = por %p141, %p142
      %p144 = scmp.ne.s32.totalorder %s133, %s134
      %p145 = scmp.eq.s32.totalorder %s23, 0
      %p146 = por %p144, %p145
      %p147 = scmp.ne.s32.totalorder %s133, %s134
      %p148 = scmp.eq.s32.totalorder %s24, 3
      %p149 = por %p147, %p148
      %p151 = scmp.ne.s32.totalorder %s134, %s150
      %p152 = scmp.eq.s32.totalorder %s24, 0
      %p153 = por %p151, %p152
      %p154 = scmp.le.s32.totalorder 1, %s18
      %p155 = scmp.lt.s32.totalorder %s18, 5
      %p156 = pnand %p154, %p155
      %p157 = pneg %p156
      // Predicated region
      $region9: #{tpu_custom_call.1} parent=5 // pred_check
        _
      $region10: #{tpu_custom_call.1} parent=5 // pred_check_branch
        %159 = sbr.rel (%p156) target = $region12
      $region11: #{tpu_custom_call.1} parent=5 // pred_region
        %s160 = ssub.s32 %s18, 1
      $region12: #{tpu_custom_call.1} parent=5 // pred_fallthru
        _
      %p161 = scmp.lt.s32.totalorder %s18, 4
      // Predicated region
      $region13: #{tpu_custom_call.1} parent=5 // pred_check
        %p162 = pneg %p161
      $region14: #{tpu_custom_call.1} parent=5 // pred_check_branch
        %164 = sbr.rel (%p162) target = $region16
      $region15: #{tpu_custom_call.1} parent=5 // pred_region
        // Predicated region
        $region17: #{tpu_custom_call.1} parent=15 // pred_check
          %p165 = pneg %p54
        $region18: #{tpu_custom_call.1} parent=15 // pred_check_branch
          %167 = sbr.rel (%p165) target = $region20
        $region19: #{tpu_custom_call.1} parent=15 // pred_region
          %s168 = sand.u32 %s44, 1
          %s169 = scalar_lea.sflag [#allocation3], %s168
          %s170 = sand.u32 %s44, 1
          %s171 = smul.addr %s170, 8
          %s172 = scalar_lea.vmem [#allocation2], %s171
          %s173 = smul.u32 %s25, 2
          %s174 = sadd.s32 %s173, %s26
          %s176 = ssub.s32 128, 128
          %177 = vsyncadd %s169, %s176
          %s178 = smul.addr %s174, 128
          %s179 = scalar_lea.hbm %s0, %s178
          %s181 = sshll.u32 %s172, 4
          %s182 = int_to_ptr.vmem [resolvable:$true] %s181
          %184 = dma.hbm_to_vmem [thread:$0]  %s179, 128, %s182, %s169
        $region20: #{tpu_custom_call.1} parent=15 // pred_fallthru
          _
        // Predicated region
        $region21: #{tpu_custom_call.1} parent=15 // pred_check
          %p185 = pneg %p84
        $region22: #{tpu_custom_call.1} parent=15 // pred_check_branch
          %187 = sbr.rel (%p185) target = $region24
        $region23: #{tpu_custom_call.1} parent=15 // pred_region
          %s188 = sand.u32 %s18, 1
          %s189 = scalar_lea.sflag [#allocation6], %s188
          %s190 = sand.u32 %s74, 1
          %s191 = smul.addr %s190, 8
          %s192 = scalar_lea.vmem [#allocation5], %s191
          %s193 = smul.u32 %s25, 2
          %s194 = sadd.s32 %s193, %s26
          %s196 = ssub.s32 128, 128
          %197 = vsyncadd %s189, %s196
          %s198 = smul.addr %s194, 128
          %s199 = scalar_lea.hbm %s1, %s198
          %s201 = sshll.u32 %s192, 4
          %s202 = int_to_ptr.vmem [resolvable:$true] %s201
          %204 = dma.hbm_to_vmem [thread:$0]  %s199, 128, %s202, %s189
        $region24: #{tpu_custom_call.1} parent=15 // pred_fallthru
          _
        // Predicated region
        $region25: #{tpu_custom_call.1} parent=15 // pred_check
          %p205 = pneg %p114
        $region26: #{tpu_custom_call.1} parent=15 // pred_check_branch
          %207 = sbr.rel (%p205) target = $region28
        $region27: #{tpu_custom_call.1} parent=15 // pred_region
          %s208 = sand.u32 %s18, 1
          %s209 = scalar_lea.sflag [#allocation6], %s208
          %s210 = sand.u32 %s104, 1
          %s211 = smul.addr %s210, 8
          %s212 = scalar_lea.vmem [#allocation7], %s211
          %s213 = smul.u32 %s25, 2
          %s214 = sadd.s32 %s213, %s26
          %s216 = ssub.s32 128, 128
          %217 = vsyncadd %s209, %s216
          %s218 = smul.addr %s214, 128
          %s219 = scalar_lea.hbm %s2, %s218
          %s221 = sshll.u32 %s212, 4
          %s222 = int_to_ptr.vmem [resolvable:$true] %s221
          %224 = dma.hbm_to_vmem [thread:$0]  %s219, 128, %s222, %s209
        $region28: #{tpu_custom_call.1} parent=15 // pred_fallthru
          _
      $region16: #{tpu_custom_call.1} parent=5 // pred_fallthru
        _
      %p225 = scmp.le.s32.totalorder 1, %s18
      %p226 = scmp.lt.s32.totalorder %s18, 5
      %p227 = pnand %p225, %p226
      %p228 = pneg %p227
      // Predicated region
      $region29: #{tpu_custom_call.1} parent=5 // pred_check
        _
      $region30: #{tpu_custom_call.1} parent=5 // pred_check_branch
        %230 = sbr.rel (%p227) target = $region32
      $region31: #{tpu_custom_call.1} parent=5 // pred_region
        %s231 = ssub.s32 %s18, 1
        %s232 = sand.u32 %s47, 1
        %s233 = scalar_lea.sflag [#allocation3], %s232
        %s234 = sand.u32 %s47, 1
        %s235 = smul.addr %s234, 8
        %s236 = scalar_lea.vmem [#allocation2], %s235
        // Predicated region
        $region33: #{tpu_custom_call.1} parent=31 // pred_check
          %p237 = pneg %p60
        $region34: #{tpu_custom_call.1} parent=31 // pred_check_branch
          %239 = sbr.rel (%p237) target = $region36
        $region35: #{tpu_custom_call.1} parent=31 // pred_region
          %240 = dma.done %s233, 128
        $region36: #{tpu_custom_call.1} parent=31 // pred_fallthru
          _
        %s241 = sand.u32 %s23, 1
        %s242 = scalar_lea.sflag [#allocation6], %s241
        %s243 = sand.u32 %s77, 1
        %s244 = smul.addr %s243, 8
        %s245 = scalar_lea.vmem [#allocation5], %s244
        // Predicated region
        $region37: #{tpu_custom_call.1} parent=31 // pred_check
          %p246 = pneg %p90
        $region38: #{tpu_custom_call.1} parent=31 // pred_check_branch
          %248 = sbr.rel (%p246) target = $region40
        $region39: #{tpu_custom_call.1} parent=31 // pred_region
          %249 = dma.done %s242, 128
        $region40: #{tpu_custom_call.1} parent=31 // pred_fallthru
          _
        %s250 = sand.u32 %s23, 1
        %s251 = scalar_lea.sflag [#allocation6], %s250
        %s252 = sand.u32 %s107, 1
        %s253 = smul.addr %s252, 8
        %s254 = scalar_lea.vmem [#allocation7], %s253
        // Predicated region
        $region41: #{tpu_custom_call.1} parent=31 // pred_check
          %p255 = pneg %p120
        $region42: #{tpu_custom_call.1} parent=31 // pred_check_branch
          %257 = sbr.rel (%p255) target = $region44
        $region43: #{tpu_custom_call.1} parent=31 // pred_region
          %258 = dma.done %s251, 128
        $region44: #{tpu_custom_call.1} parent=31 // pred_fallthru
          _
        %s259 = sand.u32 %s47, 1
        %s260 = scalar_lea.sflag [#allocation3], %s259
        %s261 = sand.u32 %s47, 1
        %s262 = smul.addr %s261, 8
        %s263 = scalar_lea.vmem [#allocation2], %s262
        %p264 = pneg %p60
        %p265 = pneg %p57
        %s266 = sand.u32 %s23, 1
        %s267 = scalar_lea.sflag [#allocation6], %s266
        %s268 = sand.u32 %s77, 1
        %s269 = smul.addr %s268, 8
        %s270 = scalar_lea.vmem [#allocation5], %s269
        %p271 = pneg %p90
        %p272 = pneg %p87
        %s273 = sand.u32 %s23, 1
        %s274 = scalar_lea.sflag [#allocation6], %s273
        %s275 = sand.u32 %s107, 1
        %s276 = smul.addr %s275, 8
        %s277 = scalar_lea.vmem [#allocation7], %s276
        %p278 = pneg %p120
        %p279 = pneg %p117
        %p280 = pneg %p146
        %p281 = pneg %p143
        %s282 = sand.u32 %s133, 1
        %s283 = scalar_lea.sflag [#allocation4], %s282
        %s284 = sand.u32 %s133, 1
        %s285 = smul.addr %s284, 8
        %s286 = scalar_lea.vmem [#allocation8], %s285
        %s287 = smul.u32 %s27, 2
        %s288 = sadd.s32 %s287, %s28
        %s289 = smul.u32 %s27, 2
        %s290 = sadd.s32 %s289, %s28
        %s291 = smul.u32 %s27, 2
        %s292 = sadd.s32 %s291, %s28
        %p293 = scmp.eq.s32.totalorder %s28, 0
        // Predicated region
        $region45: #{tpu_custom_call.1} parent=31 // pred_check
          %p294 = pneg %p293
        $region46: #{tpu_custom_call.1} parent=31 // pred_check_branch
          %296 = sbr.rel (%p294) target = $region48
        $region47: #{tpu_custom_call.1} parent=31 // pred_region
          %297 = vst [vmem:[%s286] sm:$0xff] 0.0
        $region48: #{tpu_custom_call.1} parent=31 // pred_fallthru
          _
        %v298 = vld [vmem:[%s236] sm:$0xff]
        %v299 = vld [vmem:[%s245] sm:$0xff]
        %v300 = vld [vmem:[%s254] sm:$0xff]
        %v301 = vsub.f32 %v300, %v299
        %v302 = vand.u32 2147483647, %v301
        %v303 = vadd.f32 %v298, %v302
        %v304 = vld [vmem:[%s286] sm:$0xff]
        %v305 = vadd.f32 %v303, 0.0
        %v306 = vadd.f32 %v304, %v305
        %307 = vst [vmem:[%s286] sm:$0xff] %v306
        %s308 = sand.u32 %s133, 1
        %s309 = scalar_lea.sflag [#allocation4], %s308
        %s310 = sand.u32 %s133, 1
        %s311 = smul.addr %s310, 8
        %s312 = scalar_lea.vmem [#allocation8], %s311
        // Predicated region
        $region49: #{tpu_custom_call.1} parent=31 // pred_check
          %p313 = pneg %p143
        $region50: #{tpu_custom_call.1} parent=31 // pred_check_branch
          %315 = sbr.rel (%p313) target = $region52
        $region51: #{tpu_custom_call.1} parent=31 // pred_region
          %s317 = ssub.s32 128, 128
          %318 = vsyncadd %s309, %s317
          %s319 = smul.addr %s27, 128
          %s320 = scalar_lea.hbm %s3, %s319
          %s322 = sshll.u32 %s312, 4
          %s323 = int_to_ptr.vmem [resolvable:$true] %s322
          %325 = dma.vmem_to_hbm [thread:$0]  %s323, 128, %s320, %s309
        $region52: #{tpu_custom_call.1} parent=31 // pred_fallthru
          _
      $region32: #{tpu_custom_call.1} parent=5 // pred_fallthru
        _
      %p326 = scmp.le.s32.totalorder 2, %s18
      // Predicated region
      $region53: #{tpu_custom_call.1} parent=5 // pred_check
        %p327 = pneg %p326
      $region54: #{tpu_custom_call.1} parent=5 // pred_check_branch
        %329 = sbr.rel (%p327) target = $region56
      $region55: #{tpu_custom_call.1} parent=5 // pred_region
        %s330 = ssub.s32 %s18, 2
        // Predicated region
        $region57: #{tpu_custom_call.1} parent=55 // pred_check
          %p331 = pneg %p149
        $region58: #{tpu_custom_call.1} parent=55 // pred_check_branch
          %333 = sbr.rel (%p331) target = $region60
        $region59: #{tpu_custom_call.1} parent=55 // pred_region
          %s334 = sand.u32 %s134, 1
          %s335 = scalar_lea.sflag [#allocation4], %s334
          %s336 = sand.u32 %s134, 1
          %s337 = smul.addr %s336, 8
          %s338 = scalar_lea.vmem [#allocation8], %s337
          %339 = dma.done %s335, 128
        $region60: #{tpu_custom_call.1} parent=55 // pred_fallthru
          _
      $region56: #{tpu_custom_call.1} parent=5 // pred_fallthru
        _
    $region6: #{tpu_custom_call.1} parent=1 // loop_footer
      %s22 = sadd.s32 1, %s18
    $region7: #{tpu_custom_call.1} parent=1 // loop_footer_branch
      %17 = sbr.rel target = $region3
    $region8: #{tpu_custom_call.1} parent=1 // loop_exit
      _
    %340 = vsyncpa [#allocation3], 1
    %s341 = scalar_lea.sflag [#allocation3], 1
    %342 = vsyncpa %s341, 1
    %343 = vsyncpa [#allocation6], 1
    %s344 = scalar_lea.sflag [#allocation6], 1
    %345 = vsyncpa %s344, 1
    %346 = vsyncpa [#allocation4], 1
    %s347 = scalar_lea.sflag [#allocation4], 1
    %348 = vsyncpa %s347, 1

</llo_original>
